<compile_context>
chip_gen: v7x
topology: tpu7x:2x2x1
jax: 0.10.0
libtpu: 0.0.40
codegen_flags: <defaults>
</compile_context>

<pallas_src>
import functools

import jax
import jax.numpy as jnp
from jax.experimental import pallas as pl
from jax.experimental.pallas import tpu as pltpu

_LANE = 128
_SUBLANE = 8
_TILE_BYTES_TARGET = 2 * 1024 * 1024  # per logits buffer (x2 pipeline buffers)


def _pow_static(x, gamma: float):
    """x**gamma with a multiply chain for small integer gamma (avoids EUP power)."""
    g = float(gamma)
    if g == 0.0:
        return jnp.ones_like(x)
    if g.is_integer() and 1.0 <= g <= 8.0:
        y = x
        for _ in range(int(g) - 1):
            y = y * x
        return y
    return jnp.power(x, g)


def _focal_rows_kernel(x_ref, tgt_ref, alpha_ref, out_ref, acc_ref, *,
                       gamma: float, n_total: int, denom: float):
    """Classes-on-lanes layout (C >= 128).  x:(TN,C)  tgt:(TN,1)  alpha:(1,C)."""
    i = pl.program_id(0)

    @pl.when(i == 0)
    def _():
        acc_ref[...] = jnp.zeros_like(acc_ref)

    x = x_ref[...].astype(jnp.float32)            # (TN, C)
    tgt = tgt_ref[...]                            # (TN, 1) int32
    alpha = alpha_ref[...].astype(jnp.float32)    # (1, C)
    tn, c = x.shape

    col = jax.lax.broadcasted_iota(jnp.int32, (tn, c), 1)
    onehot = col == tgt                           # (TN, C)

    m = jnp.max(x, axis=-1, keepdims=True)                                   # (TN,1)
    lse = m + jnp.log(jnp.sum(jnp.exp(x - m), axis=-1, keepdims=True))       # (TN,1)
    logit_t = jnp.sum(jnp.where(onehot, x, 0.0), axis=-1, keepdims=True)     # (TN,1)
    alpha_t = jnp.sum(jnp.where(onehot, jnp.broadcast_to(alpha, (tn, c)), 0.0),
                      axis=-1, keepdims=True)                                # (TN,1)

    ce = jnp.maximum(lse - logit_t, 0.0)          # clamp: fp rounding could give pt>1
    pt = jnp.exp(-ce)
    focal = alpha_t * _pow_static(1.0 - pt, gamma) * ce                      # (TN,1)

    # Mask rows of a partial last tile (block may overhang the global batch).
    row = jax.lax.broadcasted_iota(jnp.int32, (tn, 1), 0) + i * tn
    focal = jnp.where(row < n_total, focal, 0.0)

    acc_ref[...] += jnp.sum(focal, keepdims=True)

    @pl.when(i == pl.num_programs(0) - 1)
    def _():
        out_ref[...] = acc_ref[...] * jnp.float32(1.0 / denom)


def _focal_cols_kernel(x_ref, tgt_ref, alpha_ref, out_ref, acc_ref, *,
                       gamma: float, n_total: int, denom: float):
    """Batch-on-lanes layout (C < 128).  x:(C,TN)  tgt:(1,TN)  alpha:(C,1)."""
    i = pl.program_id(0)

    @pl.when(i == 0)
    def _():
        acc_ref[...] = jnp.zeros_like(acc_ref)

    x = x_ref[...].astype(jnp.float32)            # (C, TN)
    tgt = tgt_ref[...]                            # (1, TN) int32
    alpha = alpha_ref[...].astype(jnp.float32)    # (C, 1)
    c, tn = x.shape

    cls = jax.lax.broadcasted_iota(jnp.int32, (c, tn), 0)
    onehot = cls == tgt                           # (C, TN)

    m = jnp.max(x, axis=0, keepdims=True)                                    # (1,TN)
    lse = m + jnp.log(jnp.sum(jnp.exp(x - m), axis=0, keepdims=True))        # (1,TN)
    logit_t = jnp.sum(jnp.where(onehot, x, 0.0), axis=0, keepdims=True)      # (1,TN)
    alpha_t = jnp.sum(jnp.where(onehot, jnp.broadcast_to(alpha, (c, tn)), 0.0),
                      axis=0, keepdims=True)                                 # (1,TN)

    ce = jnp.maximum(lse - logit_t, 0.0)
    pt = jnp.exp(-ce)
    focal = alpha_t * _pow_static(1.0 - pt, gamma) * ce                      # (1,TN)

    col = jax.lax.broadcasted_iota(jnp.int32, (1, tn), 1) + i * tn
    focal = jnp.where(col < n_total, focal, 0.0)

    acc_ref[...] += jnp.sum(focal, keepdims=True)

    @pl.when(i == pl.num_programs(0) - 1)
    def _():
        out_ref[...] = acc_ref[...] * jnp.float32(1.0 / denom)


def _round_up(x: int, m: int) -> int:
    return (x + m - 1) // m * m


def _auto_tile(n: int, c: int, itemsize: int, align: int, cap: int) -> int:
    t = max(align, min(_TILE_BYTES_TARGET // max(1, c * itemsize), cap))
    t = (t // align) * align
    return n if t >= n else int(t)


def _legalize_tile(tile: int, n: int, align: int) -> int:
    t = _round_up(max(1, int(tile)), align)
    return n if t >= n else t


def multi_class_focal_loss(logits, targets, alpha=None, gamma=2.0,
                           reduction="mean", tile_n=None):
    """Pallas TPU forward of MultiClassFocalLoss (reduction 'mean' or 'sum')."""
    if reduction not in ("mean", "sum"):
        # TODO(synk): reduction='none' (per-sample vector output) is not wired
        # through the reduced-scalar kernel; only 'mean' / 'sum' are implemented.
        raise NotImplementedError("reduction must be 'mean' or 'sum'")

    logits = jnp.asarray(logits)
    n, c = logits.shape
    targets = jnp.asarray(targets).astype(jnp.int32)
    if alpha is None:
        alpha_vec = jnp.ones((c,), dtype=jnp.float32)
    else:
        alpha_vec = jnp.asarray(alpha, dtype=jnp.float32)
    # TODO(synk): out-of-range targets (e.g. an ignore_index) silently contribute 0
    # instead of raising / being excluded like torch.nn.functional.cross_entropy.

    itemsize = jnp.dtype(logits.dtype).itemsize
    denom = float(n) if reduction == "mean" else 1.0
    compiler_params = pltpu.CompilerParams(dimension_semantics=("arbitrary",))

    if c >= _LANE:
        # Classes already fill the lanes: keep (N, C), tile the batch on sublanes.
        tn = (_auto_tile(n, c, itemsize, _SUBLANE, 1024) if tile_n is None
              else _legalize_tile(tile_n, n, _SUBLANE))
        kernel = functools.partial(_focal_rows_kernel, gamma=float(gamma),
                                   n_total=n, denom=denom)
        out = pl.pallas_call(
            kernel,
            out_shape=jax.ShapeDtypeStruct((1, 1), jnp.float32),
            grid=(pl.cdiv(n, tn),),
            in_specs=[
                pl.BlockSpec((tn, c), lambda i: (i, 0)),   # logits, native dtype
                pl.BlockSpec((tn, 1), lambda i: (i, 0)),   # targets
                pl.BlockSpec((1, c), lambda i: (0, 0)),    # alpha (broadcast)
            ],
            out_specs=pl.BlockSpec((1, 1), lambda i: (0, 0)),
            scratch_shapes=[pltpu.VMEM((1, 1), jnp.float32)],
            compiler_params=compiler_params,
        )(logits, targets.reshape(n, 1), alpha_vec.reshape(1, c))
    else:
        # Small C: put the batch on the 128-wide lane axis (lane-dense layout).
        tn = (_auto_tile(n, c, itemsize, _LANE, 8192) if tile_n is None
              else _legalize_tile(tile_n, n, _LANE))
        kernel = functools.partial(_focal_cols_kernel, gamma=float(gamma),
                                   n_total=n, denom=denom)
        out = pl.pallas_call(
            kernel,
            out_shape=jax.ShapeDtypeStruct((1, 1), jnp.float32),
            grid=(pl.cdiv(n, tn),),
            in_specs=[
                pl.BlockSpec((c, tn), lambda i: (0, i)),   # logits^T, native dtype
                pl.BlockSpec((1, tn), lambda i: (0, i)),   # targets
                pl.BlockSpec((c, 1), lambda i: (0, 0)),    # alpha (broadcast)
            ],
            out_specs=pl.BlockSpec((1, 1), lambda i: (0, 0)),
            scratch_shapes=[pltpu.VMEM((1, 1), jnp.float32)],
            compiler_params=compiler_params,
        )(logits.T, targets.reshape(1, n), alpha_vec.reshape(c, 1))

    return out[0, 0]


def _reference_focal_loss(logits, targets, alpha_vec, gamma, reduction="mean"):
    x = jnp.asarray(logits).astype(jnp.float32)
    t = jnp.asarray(targets).astype(jnp.int32)
    lse = jax.nn.logsumexp(x, axis=-1)
    ce = lse - jnp.take_along_axis(x, t[:, None], axis=-1)[:, 0]
    pt = jnp.exp(-ce)
    a = 1.0 if alpha_vec is None else jnp.asarray(alpha_vec, jnp.float32)[t]
    fl = a * (1.0 - pt) ** float(gamma) * ce
    return jnp.mean(fl) if reduction == "mean" else jnp.sum(fl)


if __name__ == "__main__":
    key = jax.random.PRNGKey(0)
    k1, k2, k3, k4 = jax.random.split(key, 4)

    # Case 1: small class count -> lane-dense (transposed) path, tiled batch with a
    # partial last tile (300 = 2*128 + 44), per-class alpha, gamma=2, f32 inputs.
    n1, c1 = 300, 32
    logits1 = jax.random.normal(k1, (n1, c1), dtype=jnp.float32) * 2.0
    targets1 = jax.random.randint(k2, (n1,), 0, c1, dtype=jnp.int32)
    alpha1 = 0.5 + jnp.arange(c1, dtype=jnp.float32) / c1
    loss1 = jax.block_until_ready(
        multi_class_focal_loss(logits1, targets1, alpha=alpha1, gamma=2.0,
                               reduction="mean", tile_n=128))
    ref1 = _reference_focal_loss(logits1, targets1, alpha1, 2.0, "mean")
    assert jnp.allclose(loss1, ref1, rtol=1e-5, atol=1e-6), (loss1, ref1)

    # Case 2: large class count -> row path, bf16 logits streamed in native dtype,
    # alpha=None, partial last tile (100 = 2*48 + 4).
    n2, c2 = 100, 256
    logits2 = (jax.random.normal(k3, (n2, c2), dtype=jnp.float32) * 2.0
               ).astype(jnp.bfloat16)
    targets2 = jax.random.randint(k4, (n2,), 0, c2, dtype=jnp.int32)
    loss2 = jax.block_until_ready(
        multi_class_focal_loss(logits2, targets2, alpha=None, gamma=2.0,
                               reduction="mean", tile_n=48))
    ref2 = _reference_focal_loss(logits2, targets2, None, 2.0, "mean")
    assert jnp.allclose(loss2, ref2, rtol=1e-5, atol=1e-6), (loss2, ref2)

    # Case 3: auto tile size, 'sum' reduction, integer gamma=3 multiply chain.
    loss3 = jax.block_until_ready(
        multi_class_focal_loss(logits1, targets1, alpha=alpha1, gamma=3,
                               reduction="sum"))
    ref3 = _reference_focal_loss(logits1, targets1, alpha1, 3.0, "sum")
    assert jnp.allclose(loss3, ref3, rtol=1e-4, atol=1e-4), (loss3, ref3)

    print("KERNEL_OK")
</pallas_src>

<mosaic_0001>
module attributes {stable_mosaic.version = 11 : i64} {
  func.func @_focal_cols_kernel(%arg0: i32, %arg1: memref<32x128xf32, #tpu.memory_space<vmem>>, %arg2: memref<1x128xi32, #tpu.memory_space<vmem>>, %arg3: memref<32x1xf32, #tpu.memory_space<vmem>>, %arg4: memref<1x1xf32, #tpu.memory_space<vmem>>, %arg5: memref<1x1xf32, #tpu.memory_space<vmem>>) attributes {dimension_semantics = [#tpu.dimension_semantics<arbitrary>], iteration_bounds = array<i64: 3>, scalar_prefetch = 0 : i64, scratch_operands = 1 : i64, tpu.core_type = #tpu.core_type<tc>, window_params = [{transform_indices = @transform_0, window_bounds = array<i64: 32, 128>}, {transform_indices = @transform_1, window_bounds = array<i64: 1, 128>}, {pipeline_mode = #tpu.pipeline_mode<synchronous>, transform_indices = @transform_2, window_bounds = array<i64: 32, 1>}, {pipeline_mode = #tpu.pipeline_mode<synchronous>, transform_indices = @transform_3, window_bounds = array<i64: 1, 1>}]} {
    %c0_i32 = arith.constant 0 : i32
    %0 = arith.cmpi eq, %arg0, %c0_i32 : i32
    %1 = arith.extui %0 : i1 to i32
    %c0_i32_0 = arith.constant 0 : i32
    %2 = arith.cmpi ne, %1, %c0_i32_0 : i32
    scf.if %2 {
      %cst_21 = arith.constant 0.000000e+00 : f32
      %58 = vector.broadcast %cst_21 : f32 to vector<1x1xf32>
      %c0_22 = arith.constant 0 : index
      %c0_23 = arith.constant 0 : index
      %59 = vector.load %arg5[%c0_22, %c0_23] : memref<1x1xf32, #tpu.memory_space<vmem>>, vector<1x1xf32>
      tpu.vector_store %arg5[%c0_22, %c0_23], %58 {strides = array<i32>} : memref<1x1xf32, #tpu.memory_space<vmem>>, vector<1x1xf32>,
    } else {
    }
    %c0 = arith.constant 0 : index
    %c0_1 = arith.constant 0 : index
    %3 = vector.load %arg1[%c0, %c0_1] : memref<32x128xf32, #tpu.memory_space<vmem>>, vector<32x128xf32>
    %c0_2 = arith.constant 0 : index
    %c0_3 = arith.constant 0 : index
    %4 = vector.load %arg2[%c0_2, %c0_3] : memref<1x128xi32, #tpu.memory_space<vmem>>, vector<1x128xi32>
    %c0_4 = arith.constant 0 : index
    %c0_5 = arith.constant 0 : index
    %5 = vector.load %arg3[%c0_4, %c0_5] : memref<32x1xf32, #tpu.memory_space<vmem>>, vector<32x1xf32>
    %6 = tpu.iota {dimensions = array<i32: 0>} : vector<32x128xi32>
    %7 = vector.broadcast %4 : vector<1x128xi32> to vector<32x128xi32>
    %8 = arith.cmpi eq, %6, %7 : vector<32x128xi32>
    %cst = arith.constant dense<0xFF800000> : vector<128xf32>
    %9 = vector.multi_reduction <maximumf>, %3, %cst [0] : vector<32x128xf32> to vector<128xf32>
    %10 = vector.shape_cast %9 : vector<128xf32> to vector<1x128xf32>
    %11 = vector.broadcast %10 : vector<1x128xf32> to vector<32x128xf32>
    %12 = arith.subf %3, %11 : vector<32x128xf32>
    %13 = math.exp %12 : vector<32x128xf32>
    %cst_6 = arith.constant dense<0.000000e+00> : vector<128xf32>
    %14 = vector.multi_reduction <add>, %13, %cst_6 [0] : vector<32x128xf32> to vector<128xf32>
    %15 = vector.shape_cast %14 : vector<128xf32> to vector<1x128xf32>
    %16 = math.log %15 : vector<1x128xf32>
    %17 = arith.addf %10, %16 : vector<1x128xf32>
    %cst_7 = arith.constant 0.000000e+00 : f32
    %18 = vector.broadcast %cst_7 : f32 to vector<32x128xf32>
    %19 = arith.select %8, %3, %18 : vector<32x128xi1>, vector<32x128xf32>
    %cst_8 = arith.constant dense<0.000000e+00> : vector<128xf32>
    %20 = vector.multi_reduction <add>, %19, %cst_8 [0] : vector<32x128xf32> to vector<128xf32>
    %21 = vector.shape_cast %20 : vector<128xf32> to vector<1x128xf32>
    %22 = vector.shape_cast %5 : vector<32x1xf32> to vector<32x1xf32>
    %23 = vector.broadcast %22 : vector<32x1xf32> to vector<32x128xf32>
    %cst_9 = arith.constant 0.000000e+00 : f32
    %24 = vector.broadcast %cst_9 : f32 to vector<32x128xf32>
    %25 = arith.select %8, %23, %24 : vector<32x128xi1>, vector<32x128xf32>
    %cst_10 = arith.constant dense<0.000000e+00> : vector<128xf32>
    %26 = vector.multi_reduction <add>, %25, %cst_10 [0] : vector<32x128xf32> to vector<128xf32>
    %27 = vector.shape_cast %26 : vector<128xf32> to vector<1x128xf32>
    %28 = arith.subf %17, %21 : vector<1x128xf32>
    %cst_11 = arith.constant 0.000000e+00 : f32
    %29 = vector.broadcast %cst_11 : f32 to vector<1x128xf32>
    %30 = arith.maximumf %28, %29 : vector<1x128xf32>
    %cst_12 = arith.constant 0.000000e+00 : f32
    %31 = vector.broadcast %cst_12 : f32 to vector<1x128xf32>
    %32 = arith.subf %31, %30 : vector<1x128xf32>
    %33 = math.exp %32 : vector<1x128xf32>
    %cst_13 = arith.constant 1.000000e+00 : f32
    %34 = vector.broadcast %cst_13 : f32 to vector<1x128xf32>
    %35 = arith.subf %34, %33 : vector<1x128xf32>
    %36 = arith.mulf %35, %35 : vector<1x128xf32>
    %37 = arith.mulf %27, %36 : vector<1x128xf32>
    %38 = arith.mulf %37, %30 : vector<1x128xf32>
    %39 = tpu.iota {dimensions = array<i32: 1>} : vector<1x128xi32>
    %c128_i32 = arith.constant 128 : i32
    %40 = arith.muli %arg0, %c128_i32 : i32
    %41 = vector.broadcast %40 : i32 to vector<1x128xi32>
    %42 = arith.addi %39, %41 : vector<1x128xi32>
    %c300_i32 = arith.constant 300 : i32
    %43 = vector.broadcast %c300_i32 : i32 to vector<1x128xi32>
    %44 = arith.cmpi slt, %42, %43 : vector<1x128xi32>
    %cst_14 = arith.constant 0.000000e+00 : f32
    %45 = vector.broadcast %cst_14 : f32 to vector<1x128xf32>
    %46 = arith.select %44, %38, %45 : vector<1x128xi1>, vector<1x128xf32>
    %c0_15 = arith.constant 0 : index
    %c0_16 = arith.constant 0 : index
    %47 = vector.load %arg5[%c0_15, %c0_16] : memref<1x1xf32, #tpu.memory_space<vmem>>, vector<1x1xf32>
    %48 = vector.shape_cast %46 : vector<1x128xf32> to vector<1x1x128xf32>
    %cst_17 = arith.constant dense<0.000000e+00> : vector<1xf32>
    %49 = vector.multi_reduction <add>, %48, %cst_17 [1, 2] : vector<1x1x128xf32> to vector<1xf32>
    %50 = vector.shape_cast %49 : vector<1xf32> to vector<1x1x1xf32>
    %51 = vector.extract %50[0, 0, 0] : f32 from vector<1x1x1xf32>
    %52 = vector.broadcast %51 : f32 to vector<1x1xf32>
    %53 = arith.addf %47, %52 : vector<1x1xf32>
    %c0_18 = arith.constant 0 : index
    %c0_19 = arith.constant 0 : index
    %54 = vector.load %arg5[%c0_18, %c0_19] : memref<1x1xf32, #tpu.memory_space<vmem>>, vector<1x1xf32>
    tpu.vector_store %arg5[%c0_18, %c0_19], %53 {strides = array<i32>} : memref<1x1xf32, #tpu.memory_space<vmem>>, vector<1x1xf32>,
    %c2_i32 = arith.constant 2 : i32
    %55 = arith.cmpi eq, %arg0, %c2_i32 : i32
    %56 = arith.extui %55 : i1 to i32
    %c0_i32_20 = arith.constant 0 : i32
    %57 = arith.cmpi ne, %56, %c0_i32_20 : i32
    scf.if %57 {
      %c0_21 = arith.constant 0 : index
      %c0_22 = arith.constant 0 : index
      %58 = vector.load %arg5[%c0_21, %c0_22] : memref<1x1xf32, #tpu.memory_space<vmem>>, vector<1x1xf32>
      %cst_23 = arith.constant 0.00333333341 : f32
      %59 = vector.broadcast %cst_23 : f32 to vector<1x1xf32>
      %60 = arith.mulf %58, %59 : vector<1x1xf32>
      %c0_24 = arith.constant 0 : index
      %c0_25 = arith.constant 0 : index
      %61 = vector.load %arg4[%c0_24, %c0_25] : memref<1x1xf32, #tpu.memory_space<vmem>>, vector<1x1xf32>
      tpu.vector_store %arg4[%c0_24, %c0_25], %60 {strides = array<i32>} : memref<1x1xf32, #tpu.memory_space<vmem>>, vector<1x1xf32>,
    } else {
    }
    return
  }
  func.func @transform_0(%arg0: i32) -> (i32, i32) {
    %c0_i32 = arith.constant 0 : i32
    %c0_i32_0 = arith.constant 0 : i32
    return %c0_i32, %arg0 : i32, i32
  }
  func.func @transform_1(%arg0: i32) -> (i32, i32) {
    %c0_i32 = arith.constant 0 : i32
    %c0_i32_0 = arith.constant 0 : i32
    return %c0_i32, %arg0 : i32, i32
  }
  func.func @transform_2(%arg0: i32) -> (i32, i32) {
    %c0_i32 = arith.constant 0 : i32
    %c0_i32_0 = arith.constant 0 : i32
    %c0_i32_1 = arith.constant 0 : i32
    return %c0_i32, %c0_i32_0 : i32, i32
  }
  func.func @transform_3(%arg0: i32) -> (i32, i32) {
    %c0_i32 = arith.constant 0 : i32
    %c0_i32_0 = arith.constant 0 : i32
    %c0_i32_1 = arith.constant 0 : i32
    return %c0_i32, %c0_i32_0 : i32, i32
  }
}

</mosaic_0001>

<llo_original>
// kernel: tpu_custom_call.1
$region0: #{tpu_custom_call.1}
  #allocation0 [shape = 'u32[]', space=smem, size = 0x4, offset = 0x4, fixed_abs, tag = 'smem constant byte address 0x4 - core index']
  #allocation1 [shape = 'u32[144,128]{1,0:T(1,128)}', space=vmem, size = 0x12000, scoped, tag = 'internal scratch']
  #allocation2 [shape = 'f32[1,1]{1,0:T(1,128)}', space=vmem, size = 0x200, scoped, tag = 'scratch operand']
  %s0 = inlined_call_operand.hbm [shape: f32[32,300], index: 0, kind: input, shape index: {}]
  %s1 = inlined_call_operand.vmem [shape: s32[1,300], index: 1, kind: input, shape index: {}]
  %s2 = inlined_call_operand.vmem [shape: f32[32,1], index: 2, kind: input, shape index: {}]
  %s3 = inlined_call_operand.hbm [shape: f32[1,1], index: 3, kind: output, shape index: {}]
  %s4 = sld [smem:[#allocation0]]
  $region57: #{tpu_custom_call.1} parent=0
    _
  %s6 = ssub.s32 1, %s4
  %s7 = scalar_select 0, %s6, %s4
  $region1: #{tpu_custom_call.1} parent=0
    #allocation3 [shape = 'u8[32768]{0}', space=vmem, size = 0x8000, scoped, tag = 'input window, operand 0']
    #allocation4 [shape = 's32[2]{0}', space=sflag, size = 0x8, scoped, tag = 'scoped memory for tpu_custom_call.1']
    #allocation5 [shape = 's32[2]{0}', space=sflag, size = 0x8, scoped, tag = 'scoped memory for tpu_custom_call.1']
    #allocation6 [shape = 'u8[512]{0}', space=vmem, size = 0x400, scoped, tag = 'output window, operand 0, single buffered']
    %8 = vsyncpa [#allocation4], 0
    %s9 = scalar_lea.sflag [#allocation4], 1
    %10 = vsyncpa %s9, 0
    %11 = vsyncpa [#allocation5], 0
    loop: start=0, step=1, limit=5
    $region2: #{tpu_custom_call.1} parent=1 // loop_pre_header
      _
    $region3: #{tpu_custom_call.1} parent=1 // loop_header
      %s13 = sphi 0, %s17
      %p14 = scmp.ge.s32.totalorder %s13, 5
      %s23 = sphi 0, %s25
      %s26 = sphi 0, %s23
      %s27 = sphi 0, %s26
      %s43 = sphi 0, %s27
      %s49 = sphi 0, %s51
      %s52 = sphi 0, %s49
      %s53 = sphi 0, %s52
      %s69 = sphi 0, %s53
      %s73 = sphi 0, %s73
      %s75 = sphi 0, %s73
      %s76 = sphi 0, %s75
      %s90 = sphi 0, %s76
      %s94 = sphi 0, %s94
      %s96 = sphi 0, %s94
      %s97 = sphi 0, %s96
      %s111 = sphi 0, %s97
    $region4: #{tpu_custom_call.1} parent=1 // loop_header_branch
      %16 = sbr.rel (%p14) target = $region8
    $region5: #{tpu_custom_call.1} parent=1 // loop_body
      %s18 = ssub.s32 %s13, 1
      %s19 = ssub.s32 %s13, 2
      %s20 = sadd.s32 %s13, 1
      %s21 = ssub.s32 %s13, %s20
      %p22 = scmp.eq.s32.totalorder %s21, 0
      %s24 = sadd.s32 %s23, 1
      %s25 = scalar_select %p22, %s23, %s24
      %p28 = pneg %p22
      %p29 = scmp.eq.s32.totalorder %s13, 2
      %p30 = por %p28, %p29
      %p31 = scmp.ne.s32.totalorder %s23, %s26
      %p32 = scmp.eq.s32.totalorder %s13, 0
      %p33 = por %p31, %p32
      %p34 = scmp.ne.s32.totalorder %s23, %s26
      %p35 = scmp.eq.s32.totalorder %s18, 2
      %p36 = por %p34, %p35
      %p37 = scmp.ne.s32.totalorder %s26, %s27
      %p38 = scmp.eq.s32.totalorder %s18, 0
      %p39 = por %p37, %p38
      %p40 = scmp.ne.s32.totalorder %s26, %s27
      %p41 = scmp.eq.s32.totalorder %s19, 2
      %p42 = por %p40, %p41
      %p44 = scmp.ne.s32.totalorder %s27, %s43
      %p45 = scmp.eq.s32.totalorder %s19, 0
      %p46 = por %p44, %p45
      %s47 = ssub.s32 %s13, %s20
      %p48 = scmp.eq.s32.totalorder %s47, 0
      %s50 = sadd.s32 %s49, 1
      %s51 = scalar_select %p48, %s49, %s50
      %p54 = pneg %p48
      %p55 = scmp.eq.s32.totalorder %s13, 2
      %p56 = por %p54, %p55
      %p57 = scmp.ne.s32.totalorder %s49, %s52
      %p58 = scmp.eq.s32.totalorder %s13, 0
      %p59 = por %p57, %p58
      %p60 = scmp.ne.s32.totalorder %s49, %s52
      %p61 = scmp.eq.s32.totalorder %s18, 2
      %p62 = por %p60, %p61
      %p63 = scmp.ne.s32.totalorder %s52, %s53
      %p64 = scmp.eq.s32.totalorder %s18, 0
      %p65 = por %p63, %p64
      %p66 = scmp.ne.s32.totalorder %s52, %s53
      %p67 = scmp.eq.s32.totalorder %s19, 2
      %p68 = por %p66, %p67
      %p70 = scmp.ne.s32.totalorder %s53, %s69
      %p71 = scmp.eq.s32.totalorder %s19, 0
      %p72 = por %p70, %p71
      %s74 = sadd.s32 %s73, 1
      %p77 = scmp.eq.s32.totalorder %s13, 2
      %p78 = scmp.ne.s32.totalorder %s73, %s75
      %p79 = scmp.eq.s32.totalorder %s13, 0
      %p80 = por %p78, %p79
      %p81 = scmp.ne.s32.totalorder %s73, %s75
      %p82 = scmp.eq.s32.totalorder %s18, 2
      %p83 = por %p81, %p82
      %p84 = scmp.ne.s32.totalorder %s75, %s76
      %p85 = scmp.eq.s32.totalorder %s18, 0
      %p86 = por %p84, %p85
      %p87 = scmp.ne.s32.totalorder %s75, %s76
      %p88 = scmp.eq.s32.totalorder %s19, 2
      %p89 = por %p87, %p88
      %p91 = scmp.ne.s32.totalorder %s76, %s90
      %p92 = scmp.eq.s32.totalorder %s19, 0
      %p93 = por %p91, %p92
      %s95 = sadd.s32 %s94, 1
      %p98 = scmp.eq.s32.totalorder %s13, 2
      %p99 = scmp.ne.s32.totalorder %s94, %s96
      %p100 = scmp.eq.s32.totalorder %s13, 0
      %p101 = por %p99, %p100
      %p102 = scmp.ne.s32.totalorder %s94, %s96
      %p103 = scmp.eq.s32.totalorder %s18, 2
      %p104 = por %p102, %p103
      %p105 = scmp.ne.s32.totalorder %s96, %s97
      %p106 = scmp.eq.s32.totalorder %s18, 0
      %p107 = por %p105, %p106
      %p108 = scmp.ne.s32.totalorder %s96, %s97
      %p109 = scmp.eq.s32.totalorder %s19, 2
      %p110 = por %p108, %p109
      %p112 = scmp.ne.s32.totalorder %s97, %s111
      %p113 = scmp.eq.s32.totalorder %s19, 0
      %p114 = por %p112, %p113
      %p115 = scmp.le.s32.totalorder 1, %s13
      %p116 = scmp.lt.s32.totalorder %s13, 4
      %p117 = pnand %p115, %p116
      %p118 = pneg %p117
      // Predicated region
      $region9: #{tpu_custom_call.1} parent=5 // pred_check
        _
      $region10: #{tpu_custom_call.1} parent=5 // pred_check_branch
        %120 = sbr.rel (%p117) target = $region12
      $region11: #{tpu_custom_call.1} parent=5 // pred_region
        %s121 = ssub.s32 %s13, 1
        // Predicated region
        $region13: #{tpu_custom_call.1} parent=11 // pred_check
          %p122 = pneg %p86
        $region14: #{tpu_custom_call.1} parent=11 // pred_check_branch
          %124 = sbr.rel (%p122) target = $region16
        $region15: #{tpu_custom_call.1} parent=11 // pred_region
          _
        $region16: #{tpu_custom_call.1} parent=11 // pred_fallthru
          _
      $region12: #{tpu_custom_call.1} parent=5 // pred_fallthru
        _
      %p125 = scmp.lt.s32.totalorder %s13, 3
      // Predicated region
      $region17: #{tpu_custom_call.1} parent=5 // pred_check
        %p126 = pneg %p125
      $region18: #{tpu_custom_call.1} parent=5 // pred_check_branch
        %128 = sbr.rel (%p126) target = $region20
      $region19: #{tpu_custom_call.1} parent=5 // pred_region
        // Predicated region
        $region21: #{tpu_custom_call.1} parent=19 // pred_check
          %p129 = pneg %p33
        $region22: #{tpu_custom_call.1} parent=19 // pred_check_branch
          %131 = sbr.rel (%p129) target = $region24
        $region23: #{tpu_custom_call.1} parent=19 // pred_region
          %s132 = sand.u32 %s23, 1
          %s133 = scalar_lea.sflag [#allocation4], %s132
          %s134 = sand.u32 %s23, 1
          %s135 = smul.addr %s134, 32
          %s136 = scalar_lea.vmem [#allocation3], %s135
          %s138 = ssub.s32 512, 512
          %139 = vsyncadd %s133, %s138
          %s140 = smul.addr %s13, 128
          %s141 = scalar_lea.hbm %s0, %s140
          %s142 = sshll.u32 %s136, 4
          %s143 = int_to_ptr.vmem [resolvable:$true] %s142
          %148 = dma.hbm_to_vmem [thread:$0]  %s141, 512, %s143, %s133, 384, 128, 8
        $region24: #{tpu_custom_call.1} parent=19 // pred_fallthru
          _
        // Predicated region
        $region25: #{tpu_custom_call.1} parent=19 // pred_check
          %p149 = pneg %p59
        $region26: #{tpu_custom_call.1} parent=19 // pred_check_branch
          %151 = sbr.rel (%p149) target = $region28
        $region27: #{tpu_custom_call.1} parent=19 // pred_region
          %p152 = scmp.lt.s32.totalorder %s13, 2
          %s153 = scalar_select %p152, %s13, 2
          %s154 = scalar_lea.vmem %s1, %s153
        $region28: #{tpu_custom_call.1} parent=19 // pred_fallthru
          _
      $region20: #{tpu_custom_call.1} parent=5 // pred_fallthru
        _
      %p155 = scmp.le.s32.totalorder 1, %s13
      %p156 = scmp.lt.s32.totalorder %s13, 4
      %p157 = pnand %p155, %p156
      %p158 = pneg %p157
      // Predicated region
      $region29: #{tpu_custom_call.1} parent=5 // pred_check
        _
      $region30: #{tpu_custom_call.1} parent=5 // pred_check_branch
        %160 = sbr.rel (%p157) target = $region32
      $region31: #{tpu_custom_call.1} parent=5 // pred_region
        %s161 = ssub.s32 %s13, 1
        %s162 = sand.u32 %s26, 1
        %s163 = scalar_lea.sflag [#allocation4], %s162
        %s164 = sand.u32 %s26, 1
        %s165 = smul.addr %s164, 32
        %s166 = scalar_lea.vmem [#allocation3], %s165
        // Predicated region
        $region33: #{tpu_custom_call.1} parent=31 // pred_check
          %p167 = pneg %p39
        $region34: #{tpu_custom_call.1} parent=31 // pred_check_branch
          %169 = sbr.rel (%p167) target = $region36
        $region35: #{tpu_custom_call.1} parent=31 // pred_region
          %170 = dma.done %s163, 512
        $region36: #{tpu_custom_call.1} parent=31 // pred_fallthru
          _
        %s171 = sand.u32 %s26, 1
        %s172 = scalar_lea.sflag [#allocation4], %s171
        %s173 = sand.u32 %s26, 1
        %s174 = smul.addr %s173, 32
        %s175 = scalar_lea.vmem [#allocation3], %s174
        %p176 = pneg %p39
        %p177 = pneg %p36
        %p178 = scmp.lt.s32.totalorder %s18, 2
        %s179 = scalar_select %p178, %s18, 2
        %s180 = scalar_lea.vmem %s1, %s179
        %p181 = pneg %p65
        %p182 = pneg %p62
        %p183 = pneg %p86
        %p184 = pneg %p83
        %p185 = pneg %p107
        %p186 = pneg %p104
        %p187 = scmp.lt.s32.totalorder %s18, 2
        %s188 = scalar_select %p187, %s18, 2
        %s189 = scalar_lea.vmem %s1, %s188
        %p190 = scmp.eq.s32.totalorder %s18, 0
        // Predicated region
        $region37: #{tpu_custom_call.1} parent=31 // pred_check
          %p191 = pneg %p190
        $region38: #{tpu_custom_call.1} parent=31 // pred_check_branch
          %193 = sbr.rel (%p191) target = $region40
        $region39: #{tpu_custom_call.1} parent=31 // pred_region
          %vm194 = vcmask 0
          %195 = vst.msk [vmem:[#allocation2] sm:$0x1] %vm194, 0.0
        $region40: #{tpu_custom_call.1} parent=31 // pred_fallthru
          _
        %v196 = vld [vmem:[%s166] sm:$0xff]
        %v197 = vld [vmem:[%s166 + $0x8] sm:$0xff]
        %v198 = vld [vmem:[%s166 + $0x10] sm:$0xff]
        %v199 = vld [vmem:[%s166 + $0x18] sm:$0xff]
        %v200 = vld [vmem:[%s189] sm:$0x1]
        %v201 = vld [vmem:[%s2] sm:$0xff]
        %v202 = vld [vmem:[%s2 + $0x8] sm:$0xff]
        %v203 = vld [vmem:[%s2 + $0x10] sm:$0xff]
        %v204 = vld [vmem:[%s2 + $0x18] sm:$0xff]
        %v205 = vlaneseq
        %v206 = vshrl.u32 %v205, 7
        %v207 = vadd.s32 %v206, 8
        %v208 = vadd.s32 %v206, 16
        %v209 = vadd.s32 %v206, 24
        %v210 = vlaneseq
        %v211 = vshrl.u32 %v210, 7
        %v212 = vsub.s32 0, %v211
        %v213 = vrot.slane %v200, %v212
        %vm214 = vcmp.eq.s32.totalorder %v206, %v213
        %vm215 = vcmp.eq.s32.totalorder %v207, %v213
        %vm216 = vcmp.eq.s32.totalorder %v208, %v213
        %vm217 = vcmp.eq.s32.totalorder %v209, %v213
        %v218 = vmax.f32 %v196, %v197
        %v219 = vmax.f32 %v198, %v199
        %v220 = vmax.f32 %v218, %v219
        %v221 = vrot.slane %v220, 4
        %v222 = vmax.f32 %v220, %v221
        %v223 = vrot.slane %v222, 2
        %v224 = vmax.f32 %v222, %v223
        %v225 = vrot.slane %v224, 1
        %v226 = vmax.f32 %v224, %v225
        %v227 = vsub.f32 %v196, %v226
        %v228 = vsub.f32 %v197, %v226
        %v229 = vsub.f32 %v198, %v226
        %v230 = vsub.f32 %v199, %v226
        %v231 = vmul.f32 %v227, 1.442695
        %v232 = vpow.pop %v231
        %v233 = vmul.f32 %v228, 1.442695
        %v234 = vpow.pop %v233
        %v235 = vmul.f32 %v229, 1.442695
        %v236 = vpow.pop %v235
        %v237 = vmul.f32 %v230, 1.442695
        %v238 = vpow.pop %v237
        %v239 = vadd.f32 %v232, %v234
        %v240 = vadd.f32 %v239, %v236
        %v241 = vadd.f32 %v240, %v238
        %v242 = vrot.slane %v241, 4
        %v243 = vadd.f32 %v241, %v242
        %v244 = vrot.slane %v243, 2
        %v245 = vadd.f32 %v243, %v244
        %v246 = vrot.slane %v245, 1
        %v247 = vadd.f32 %v245, %v246
        %v248 = vlog2.pop %v247
        %v249 = vmul.f32 %v248, 0.6931472
        %v250 = vadd.f32 %v226, %v249
        %v251 = vsel %vm214, %v196, 0.0
        %v252 = vsel %vm215, %v197, 0.0
        %v253 = vsel %vm216, %v198, 0.0
        %v254 = vsel %vm217, %v199, 0.0
        %v255 = vadd.f32 %v251, %v252
        %v256 = vadd.f32 %v255, %v253
        %v257 = vadd.f32 %v256, %v254
        %v258 = vrot.slane %v257, 4
        %v259 = vadd.f32 %v257, %v258
        %v260 = vrot.slane %v259, 2
        %v261 = vadd.f32 %v259, %v260
        %v262 = vrot.slane %v261, 1
        %v263 = vadd.f32 %v261, %v262
        %265 = vset.pattern.permute.xlu0 0
        %266 = vperm.xlu0 %265, %v201
        %v267 = vpop.permute.xlu0 %266
        %270 = vset.pattern.permute.xlu0 0
        %271 = vperm.xlu0 %270, %v202
        %v272 = vpop.permute.xlu0 %271
        %275 = vset.pattern.permute.xlu0 0
        %276 = vperm.xlu0 %275, %v203
        %v277 = vpop.permute.xlu0 %276
        %280 = vset.pattern.permute.xlu0 0
        %281 = vperm.xlu0 %280, %v204
        %v282 = vpop.permute.xlu0 %281
        %v284 = vsel %vm214, %v267, 0.0
        %v285 = vsel %vm215, %v272, 0.0
        %v286 = vsel %vm216, %v277, 0.0
        %v287 = vsel %vm217, %v282, 0.0
        %v288 = vadd.f32 %v284, %v285
        %v289 = vadd.f32 %v288, %v286
        %v290 = vadd.f32 %v289, %v287
        %v291 = vrot.slane %v290, 4
        %v292 = vadd.f32 %v290, %v291
        %v293 = vrot.slane %v292, 2
        %v294 = vadd.f32 %v292, %v293
        %v295 = vrot.slane %v294, 1
        %v296 = vadd.f32 %v294, %v295
        %v297 = vsub.f32 %v250, %v263
        %v298 = vmax.f32 %v297, 0.0
        %v299 = vsub.f32 0.0, %v298
        %v300 = vmul.f32 %v299, 1.442695
        %v301 = vpow.pop %v300
        %v302 = vsub.f32 1.0, %v301
        %v303 = vmul.f32 %v302, %v302
        %v304 = vmul.f32 %v296, %v303
        %v305 = vmul.f32 %v304, %v298
        %v306 = vlaneseq
        %v307 = vand.u32 %v306, 127
        %s308 = smul.u32 %s18, 128
        %v309 = vstv %s308
        %v310 = vadd.s32 %v307, %v309
        %vm311 = vcmp.lt.s32.totalorder %v310, 300
        %v312 = vsel %vm311, %v305, 0.0
        %v313 = vld [vmem:[#allocation2] sm:$0x1]
        %vm314 = vcmask 1040384
        %v315 = vsel %vm314, %v312, 0.0
        %316 = vadd.xlane.f32.xlu0 %v315
        %v317 = vpop.xlane.xlu0 %316
        %v318 = vrot.slane %v317, 4
        %v319 = vadd.f32 %v317, %v318
        %v320 = vrot.slane %v319, 2
        %v321 = vadd.f32 %v319, %v320
        %v322 = vrot.slane %v321, 1
        %v323 = vadd.f32 %v321, %v322
        %s324 = vtos %v323
        %v325 = vstv %s324
        %v326 = vadd.f32 %v313, %v325
        %vm327 = vcmask 0
        %328 = vst.msk [vmem:[#allocation2] sm:$0x1] %vm327, %v326
        %p329 = scmp.eq.s32.totalorder %s18, 2
        // Predicated region
        $region41: #{tpu_custom_call.1} parent=31 // pred_check
          %p330 = pneg %p329
        $region42: #{tpu_custom_call.1} parent=31 // pred_check_branch
          %332 = sbr.rel (%p330) target = $region44
        $region43: #{tpu_custom_call.1} parent=31 // pred_region
          %v333 = vld [vmem:[#allocation2] sm:$0x1]
          %v334 = vmul.f32 %v333, 0.0033333334
          %335 = vst.msk [vmem:[#allocation6] sm:$0x1] %vm327, %v334
        $region44: #{tpu_custom_call.1} parent=31 // pred_fallthru
          _
        // Predicated region
        $region45: #{tpu_custom_call.1} parent=31 // pred_check
          %p336 = pneg %p104
        $region46: #{tpu_custom_call.1} parent=31 // pred_check_branch
          %338 = sbr.rel (%p336) target = $region48
        $region47: #{tpu_custom_call.1} parent=31 // pred_region
          %s340 = ssub.s32 16, 16
          %341 = vsyncadd [#allocation5], %s340
          %s343 = sshll.u32 [#allocation6], 4
          %s344 = int_to_ptr.vmem [resolvable:$true] %s343
          %346 = dma.vmem_to_hbm [thread:$0]  %s344, 16, %s3, [#allocation5]
        $region48: #{tpu_custom_call.1} parent=31 // pred_fallthru
          _
        // Predicated region
        $region49: #{tpu_custom_call.1} parent=31 // pred_check
          %p347 = pneg %p104
        $region50: #{tpu_custom_call.1} parent=31 // pred_check_branch
          %349 = sbr.rel (%p347) target = $region52
        $region51: #{tpu_custom_call.1} parent=31 // pred_region
          %350 = dma.done [#allocation5], 16
        $region52: #{tpu_custom_call.1} parent=31 // pred_fallthru
          _
      $region32: #{tpu_custom_call.1} parent=5 // pred_fallthru
        _
      %p351 = scmp.le.s32.totalorder 2, %s13
      // Predicated region
      $region53: #{tpu_custom_call.1} parent=5 // pred_check
        %p352 = pneg %p351
      $region54: #{tpu_custom_call.1} parent=5 // pred_check_branch
        %354 = sbr.rel (%p352) target = $region56
      $region55: #{tpu_custom_call.1} parent=5 // pred_region
        %s355 = ssub.s32 %s13, 2
      $region56: #{tpu_custom_call.1} parent=5 // pred_fallthru
        _
    $region6: #{tpu_custom_call.1} parent=1 // loop_footer
      %s17 = sadd.s32 1, %s13
    $region7: #{tpu_custom_call.1} parent=1 // loop_footer_branch
      %12 = sbr.rel target = $region3
    $region8: #{tpu_custom_call.1} parent=1 // loop_exit
      _
    %356 = vsyncpa [#allocation4], 1
    %s357 = scalar_lea.sflag [#allocation4], 1
    %358 = vsyncpa %s357, 1
    %359 = vsyncpa [#allocation5], 1
    %s360 = scalar_lea.sflag [#allocation5], 1
    %361 = vsyncpa %s360, 1

</llo_original>
